<compile_context>
chip_gen: v6e
topology: v6e:2x2x1
jax: 0.10.0
libtpu: 0.0.40
codegen_flags: <defaults>
</compile_context>

<pallas_src>
import numpy as np
import jax
import jax.numpy as jnp
from jax.experimental import pallas as pl
from jax.experimental.pallas import tpu as pltpu


_ROW_ALIGN = 16                          # sublane alignment (covers f32 & bf16 tiles)
_DIVISORS_128 = (1, 2, 4, 8, 16, 32, 64, 128)


def _round_up(x, m):
    return ((x + m - 1) // m) * m


def _lane_packing(D):
    """Packing factor P and padded width D_pad so P*D_pad is a multiple of 128."""
    if D <= 128:
        D_pad = next(d for d in _DIVISORS_128 if d >= D)
        return 128 // D_pad, D_pad
    return 1, _round_up(D, 128)


def prepare_bond_encoder_params(tables, *, max_fused_rows=4096,
                                table_dtype=jnp.float32):
    """Build the packed lookup table + static layout ONCE (hoisted out of the
    per-forward path -- call at parameter-init time and reuse)."""
    tables = [jnp.asarray(t, jnp.float32) for t in tables]
    dims = tuple(int(t.shape[0]) for t in tables)
    F = len(dims)
    D = int(tables[0].shape[1])
    P, D_pad = _lane_packing(D)

    prod_dims = int(np.prod(dims))
    fused = prod_dims <= max_fused_rows

    if fused:
        # Mixed-radix fusion: fused_table[a*r0+b*r1+...] = T0[a]+T1[b]+...
        # Built in f32 with the same association order as the PyTorch forward.
        Vk = prod_dims
        band_table = jnp.zeros((1, D), jnp.float32)
        for t in tables:
            n = band_table.shape[0]
            band_table = (band_table[:, None, :] + t[None, :, :]).reshape(
                n * t.shape[0], D)
        radices, r = [], 1
        for d in dims[::-1]:
            radices.append(r)
            r *= d
        radices = tuple(radices[::-1])            # radices[i] = prod(dims[i+1:])
        C = 1
        col_off = np.arange(P, dtype=np.int32) * Vk
    else:
        Vk = int(sum(dims))
        band_table = jnp.concatenate(tables, axis=0)          # [sum(dims), D]
        radices = None
        C = F
        feat_off = np.concatenate([[0], np.cumsum(dims)[:-1]]).astype(np.int32)
        col_off = (np.arange(P, dtype=np.int32)[:, None] * Vk
                   + feat_off[None, :]).reshape(-1)

    if D_pad != D:            # zero columns -> output stores stay lane-dense
        band_table = jnp.pad(band_table, ((0, 0), (0, D_pad - D)))

    # Block-diagonal P-way replication [P*Vk, P*D_pad]; pad K to a tile-aligned
    # row count (padding rows are never selected -> contribute exact zeros).
    table_rep = jnp.kron(jnp.eye(P, dtype=jnp.float32), band_table)
    K = _round_up(P * Vk, 32)
    if K != P * Vk:
        table_rep = jnp.pad(table_rep, ((0, K - P * Vk), (0, 0)))
    table_rep = table_rep.astype(table_dtype)

    return dict(table=table_rep,
                col_offsets=jnp.asarray(col_off, jnp.int32),
                dims=dims, radices=radices, fused=fused,
                D=D, D_pad=D_pad, P=P, C=C, K=K, F=F)


def _make_kernel(num_cols, lanes, mxu_dtype):
    """idx_ref:   [Gb, num_cols] int32, all offsets pre-folded in the wrapper.
       table_ref: [lanes, PD]    mxu_dtype, block-diagonal replicated table.
       out_ref:   [Gb, PD]."""

    def kernel(idx_ref, table_ref, out_ref):
        idx = idx_ref[...]
        iota = jax.lax.broadcasted_iota(jnp.int32, (1, lanes), 1)   # 1-row iota
        # One compare per packed column; balanced OR tree (short dep chains).
        masks = [idx[:, c:c + 1] == iota for c in range(num_cols)]
        while len(masks) > 1:
            nxt = [masks[i] | masks[i + 1] for i in range(0, len(masks) - 1, 2)]
            if len(masks) % 2:
                nxt.append(masks[-1])
            masks = nxt
        multihot = masks[0].astype(mxu_dtype)     # 0/1 -> exact in any dtype
        out_ref[...] = jnp.dot(
            multihot, table_ref[...], preferred_element_type=jnp.float32
        ).astype(out_ref.dtype)

    return kernel


def bond_encoder(edge_attr, params, *, edges_per_block=8192,
                 out_dtype=jnp.float32, vmem_limit_bytes=None):
    """edge_attr: [E, F] integer array; params: from prepare_bond_encoder_params."""
    dims = params["dims"]
    P, C, D, D_pad, K = (params["P"], params["C"], params["D"],
                         params["D_pad"], params["K"])
    table = params["table"]
    PD = P * D_pad

    E = int(edge_attr.shape[0])
    idx = jnp.asarray(edge_attr, jnp.int32)
    # Clamp out-of-range indices (nn.Embedding would raise).
    idx = jnp.clip(idx, 0, jnp.asarray(np.asarray(dims, np.int32) - 1)[None, :])

    if params["fused"]:
        radices = jnp.asarray(np.asarray(params["radices"], np.int32))[None, :]
        idx = jnp.sum(idx * radices, axis=1, keepdims=True)        # [E, 1]

    # Pack P edges per 128-lane output row; pad E up to a multiple of P.
    E_pad = _round_up(max(E, 1), P)
    if E_pad != E:
        idx = jnp.pad(idx, ((0, E_pad - E), (0, 0)))
    G = E_pad // P
    # Fold per-slot band offsets (+ per-feature vocab offsets in the non-fused
    # path) here as a single [1, P*C] add -- the kernel does no index math.
    idx_packed = idx.reshape(G, P * C) + params["col_offsets"][None, :]

    # Large packed-row blocks (amortise the ~0.35us/step grid overhead).
    g_target = _round_up(max(_ROW_ALIGN, edges_per_block // P), _ROW_ALIGN)
    G_BLK = min(g_target, _round_up(G, _ROW_ALIGN))
    G_pad = _round_up(G, G_BLK)
    # Keep >= 2 grid steps for big inputs so both v7x TensorCores get work.
    if G_pad // G_BLK < 2 and G > 4096:
        G_BLK = _round_up(-(-G // 2), _ROW_ALIGN)
        G_pad = _round_up(G, G_BLK)
    if G_pad != G:
        idx_packed = jnp.pad(idx_packed, ((0, G_pad - G), (0, 0)))

    if vmem_limit_bytes is None:
        est = (2 * G_BLK * 128 * 4                      # idx blocks (lane-padded)
               + 2 * G_BLK * PD * 4                     # output blocks
               + 2 * G_BLK * _round_up(K, 128) * 4      # multihot + compare temps
               + table.size * table.dtype.itemsize)
        # 32 MiB is safe on every generation; grow only for very large blocks,
        # capped for v7x's 64 MiB physical VMEM.  v5e/v6e (128 MiB physical)
        # can pass a higher explicit limit with edges_per_block ~ 16k-32k.
        vmem_limit_bytes = int(max(32 * 1024 * 1024,
                                   min(48 * 1024 * 1024, 2 * est)))

    kernel = _make_kernel(P * C, K, table.dtype)

    out_packed = pl.pallas_call(
        kernel,
        out_shape=jax.ShapeDtypeStruct((G_pad, PD), out_dtype),
        grid=(G_pad // G_BLK,),
        in_specs=[
            pl.BlockSpec((G_BLK, P * C), lambda g: (g, 0)),   # streamed indices
            pl.BlockSpec((K, PD), lambda g: (0, 0)),          # VMEM-resident table
        ],
        out_specs=pl.BlockSpec((G_BLK, PD), lambda g: (g, 0)),
        compiler_params=pltpu.CompilerParams(
            dimension_semantics=("parallel",),                # megacore-friendly
            vmem_limit_bytes=vmem_limit_bytes,
        ),
    )(idx_packed, table)

    # [G_pad, P*D_pad] -> [E, D]: drop padded columns / padded rows.
    out = out_packed.reshape(G_pad, P, D_pad)[:, :, :D].reshape(G_pad * P, D)
    return out[:E]


# ----------------------------- reference & init -----------------------------

def init_bond_tables(key, emb_dim, full_bond_feature_dims):
    """Deterministic xavier_uniform init matching torch.nn.init.xavier_uniform_."""
    tables = []
    for i, dim in enumerate(full_bond_feature_dims):
        k = jax.random.fold_in(key, i)
        bound = float(np.sqrt(6.0 / (dim + emb_dim)))
        tables.append(jax.random.uniform(k, (dim, emb_dim), jnp.float32,
                                         minval=-bound, maxval=bound))
    return tables


def bond_encoder_ref(edge_attr, tables):
    """Pure-JAX reference (mirrors the PyTorch forward)."""
    out = 0
    for i, t in enumerate(tables):
        out = out + jnp.take(t, edge_attr[..., i], axis=0)
    return out


def _make_edge_attr(key, E, full_bond_feature_dims):
    cols = []
    for i, dim in enumerate(full_bond_feature_dims):
        cols.append(jax.random.randint(jax.random.fold_in(key, i), (E, 1),
                                       0, dim, dtype=jnp.int32))
    return jnp.concatenate(cols, axis=1)


if __name__ == "__main__":
    key = jax.random.PRNGKey(0)

    emb_dim = 32
    full_bond_feature_dims = [5, 6, 3]          # OGB-style bond feature cardinalities
    tables = init_bond_tables(key, emb_dim, full_bond_feature_dims)
    params = prepare_bond_encoder_params(tables)          # fused path (5*6*3 = 90)

    # 1) small, packing-unaligned edge count (exercises E -> E_pad padding).
    E1 = 19
    ea1 = _make_edge_attr(jax.random.fold_in(key, 1), E1, full_bond_feature_dims)
    out1 = jax.block_until_ready(bond_encoder(ea1, params))
    assert out1.shape == (E1, emb_dim)
    np.testing.assert_allclose(np.asarray(out1),
                               np.asarray(bond_encoder_ref(ea1, tables)),
                               rtol=1e-5, atol=1e-5)

    # 2) multiple grid steps (small edges_per_block override to force >1 block).
    E2 = 1500
    ea2 = _make_edge_attr(jax.random.fold_in(key, 2), E2, full_bond_feature_dims)
    out2 = jax.block_until_ready(bond_encoder(ea2, params, edges_per_block=512))
    np.testing.assert_allclose(np.asarray(out2),
                               np.asarray(bond_encoder_ref(ea2, tables)),
                               rtol=1e-5, atol=1e-5)

    # 3) non-fused (concatenated-table) path, default block size.
    params_nf = prepare_bond_encoder_params(tables, max_fused_rows=1)
    out3 = jax.block_until_ready(bond_encoder(ea2, params_nf))
    np.testing.assert_allclose(np.asarray(out3),
                               np.asarray(bond_encoder_ref(ea2, tables)),
                               rtol=1e-5, atol=1e-5)

    # 4) emb_dim that does not divide 128 (exercises D -> D_pad column padding).
    emb_dim4 = 48
    tables4 = init_bond_tables(jax.random.fold_in(key, 40), emb_dim4,
                               full_bond_feature_dims)
    params4 = prepare_bond_encoder_params(tables4)
    ea4 = _make_edge_attr(jax.random.fold_in(key, 4), 37, full_bond_feature_dims)
    out4 = jax.block_until_ready(bond_encoder(ea4, params4))
    assert out4.shape == (37, emb_dim4)
    np.testing.assert_allclose(np.asarray(out4),
                               np.asarray(bond_encoder_ref(ea4, tables4)),
                               rtol=1e-5, atol=1e-5)

    # 5) optional bf16-MXU table + bf16 output path (v5e bandwidth option).
    params_bf = prepare_bond_encoder_params(tables, table_dtype=jnp.bfloat16)
    out5 = jax.block_until_ready(
        bond_encoder(ea1, params_bf, out_dtype=jnp.bfloat16))
    np.testing.assert_allclose(np.asarray(out5.astype(jnp.float32)),
                               np.asarray(bond_encoder_ref(ea1, tables)),
                               rtol=2e-2, atol=2e-2)

    print("KERNEL_OK")
</pallas_src>

<mosaic_0001>
module attributes {stable_mosaic.version = 11 : i64} {
  func.func @kernel(%arg0: i32, %arg1: memref<16x4xi32, #tpu.memory_space<vmem>>, %arg2: memref<384x128xf32, #tpu.memory_space<vmem>>, %arg3: memref<16x128xf32, #tpu.memory_space<vmem>>) attributes {dimension_semantics = [#tpu.dimension_semantics<parallel>], iteration_bounds = array<i64: 1>, scalar_prefetch = 0 : i64, scratch_operands = 0 : i64, tpu.core_type = #tpu.core_type<tc>, window_params = [{transform_indices = @transform_0, window_bounds = array<i64: 16, 4>}, {pipeline_mode = #tpu.pipeline_mode<synchronous>, transform_indices = @transform_1, window_bounds = array<i64: 384, 128>}, {transform_indices = @transform_2, window_bounds = array<i64: 16, 128>}]} {
    %c0 = arith.constant 0 : index
    %c0_0 = arith.constant 0 : index
    %0 = vector.load %arg1[%c0, %c0_0] : memref<16x4xi32, #tpu.memory_space<vmem>>, vector<16x4xi32>
    %1 = tpu.iota {dimensions = array<i32: 1>} : vector<1x384xi32>
    %2 = vector.extract_strided_slice %0 {offsets = [0, 0], sizes = [16, 1], strides = [1, 1]} : vector<16x4xi32> to vector<16x1xi32>
    %3 = vector.broadcast %2 : vector<16x1xi32> to vector<16x384xi32>
    %4 = vector.broadcast %1 : vector<1x384xi32> to vector<16x384xi32>
    %5 = arith.cmpi eq, %3, %4 : vector<16x384xi32>
    %6 = vector.extract_strided_slice %0 {offsets = [0, 1], sizes = [16, 1], strides = [1, 1]} : vector<16x4xi32> to vector<16x1xi32>
    %7 = vector.broadcast %6 : vector<16x1xi32> to vector<16x384xi32>
    %8 = vector.broadcast %1 : vector<1x384xi32> to vector<16x384xi32>
    %9 = arith.cmpi eq, %7, %8 : vector<16x384xi32>
    %10 = vector.extract_strided_slice %0 {offsets = [0, 2], sizes = [16, 1], strides = [1, 1]} : vector<16x4xi32> to vector<16x1xi32>
    %11 = vector.broadcast %10 : vector<16x1xi32> to vector<16x384xi32>
    %12 = vector.broadcast %1 : vector<1x384xi32> to vector<16x384xi32>
    %13 = arith.cmpi eq, %11, %12 : vector<16x384xi32>
    %14 = vector.extract_strided_slice %0 {offsets = [0, 3], sizes = [16, 1], strides = [1, 1]} : vector<16x4xi32> to vector<16x1xi32>
    %15 = vector.broadcast %14 : vector<16x1xi32> to vector<16x384xi32>
    %16 = vector.broadcast %1 : vector<1x384xi32> to vector<16x384xi32>
    %17 = arith.cmpi eq, %15, %16 : vector<16x384xi32>
    %18 = arith.ori %5, %9 : vector<16x384xi1>
    %19 = arith.ori %13, %17 : vector<16x384xi1>
    %20 = arith.ori %18, %19 : vector<16x384xi1>
    %21 = arith.extui %20 : vector<16x384xi1> to vector<16x384xi32>
    %22 = arith.sitofp %21 : vector<16x384xi32> to vector<16x384xf32>
    %c0_1 = arith.constant 0 : index
    %c0_2 = arith.constant 0 : index
    %23 = vector.load %arg2[%c0_1, %c0_2] : memref<384x128xf32, #tpu.memory_space<vmem>>, vector<384x128xf32>
    %cst = arith.constant dense<0.000000e+00> : vector<16x128xf32>
    %24 = tpu.matmul %22, %23, %cst {dimension_numbers = #tpu.dot_dimension_numbers<[1], [0], [0], [1], [0, 0, 1, 1], [], []>} : vector<16x384xf32>, vector<384x128xf32>, vector<16x128xf32> -> vector<16x128xf32>
    %c0_3 = arith.constant 0 : index
    %c0_4 = arith.constant 0 : index
    %25 = vector.load %arg3[%c0_3, %c0_4] : memref<16x128xf32, #tpu.memory_space<vmem>>, vector<16x128xf32>
    tpu.vector_store %arg3[%c0_3, %c0_4], %24 {strides = array<i32>} : memref<16x128xf32, #tpu.memory_space<vmem>>, vector<16x128xf32>,
    return
  }
  func.func @transform_0(%arg0: i32) -> (i32, i32) {
    %c0_i32 = arith.constant 0 : i32
    %c0_i32_0 = arith.constant 0 : i32
    return %arg0, %c0_i32 : i32, i32
  }
  func.func @transform_1(%arg0: i32) -> (i32, i32) {
    %c0_i32 = arith.constant 0 : i32
    %c0_i32_0 = arith.constant 0 : i32
    %c0_i32_1 = arith.constant 0 : i32
    return %c0_i32, %c0_i32_0 : i32, i32
  }
  func.func @transform_2(%arg0: i32) -> (i32, i32) {
    %c0_i32 = arith.constant 0 : i32
    %c0_i32_0 = arith.constant 0 : i32
    return %arg0, %c0_i32 : i32, i32
  }
}

</mosaic_0001>

<llo_original>
// kernel: tpu_custom_call.1
$region0: #{tpu_custom_call.1}
  #allocation0 [shape = 'u32[]', space=smem, size = 0x4, offset = 0x4, fixed_abs, tag = 'smem constant byte address 0x4 - core index']
  #allocation1 [shape = 'u32[144,128]{1,0:T(1,128)}', space=vmem, size = 0x12000, scoped, tag = 'internal scratch']
  %s0 = inlined_call_operand.vmem [shape: s32[16,4], index: 0, kind: input, shape index: {}]
  %s1 = inlined_call_operand.hbm [shape: f32[384,128], index: 1, kind: input, shape index: {}]
  %s2 = inlined_call_operand.hbm [shape: f32[16,128], index: 2, kind: output, shape index: {}]
  %s3 = sld [smem:[#allocation0]]
  $region22: #{tpu_custom_call.1} parent=0
    _
  %s5 = ssub.s32 1, %s3
  %s6 = scalar_select 0, %s5, %s3
  $region1: #{tpu_custom_call.1} parent=0
    #allocation2 [shape = 'u8[196608]{0}', space=vmem, size = 0x30000, scoped, tag = 'input window, operand 1, single buffered']
    #allocation3 [shape = 's32[1]{0}', space=sflag, size = 0x4, scoped, tag = 'scoped memory for tpu_custom_call.1']
    #allocation4 [shape = 's32[1]{0}', space=sflag, size = 0x4, scoped, tag = 'scoped memory for tpu_custom_call.1']
    #allocation5 [shape = 'u8[8192]{0}', space=vmem, size = 0x2000, scoped, tag = 'output window, operand 0, single buffered']
    %7 = vsyncpa [#allocation3], 0
    %8 = vsyncpa [#allocation4], 0
    // Predicated region
    $region2: #{tpu_custom_call.1} parent=1 // pred_check
      _
    $region3: #{tpu_custom_call.1} parent=1 // pred_check_branch
      %10 = sbr.rel (0) target = $region5
    $region4: #{tpu_custom_call.1} parent=1 // pred_region
      _
    $region5: #{tpu_custom_call.1} parent=1 // pred_fallthru
      _
    // Predicated region
    $region6: #{tpu_custom_call.1} parent=1 // pred_check
      _
    $region7: #{tpu_custom_call.1} parent=1 // pred_check_branch
      %12 = sbr.rel (0) target = $region9
    $region8: #{tpu_custom_call.1} parent=1 // pred_region
      %s14 = ssub.s32 6144, 6144
      %15 = vsyncadd [#allocation3], %s14
      %s16 = sshll.u32 [#allocation2], 4
      %s17 = int_to_ptr.vmem [resolvable:$true] %s16
      %22 = dma.hbm_to_vmem [thread:$0]  %s1, 6144, %s17, [#allocation3], 128, 128, 8
    $region9: #{tpu_custom_call.1} parent=1 // pred_fallthru
      _
    // Predicated region
    $region10: #{tpu_custom_call.1} parent=1 // pred_check
      _
    $region11: #{tpu_custom_call.1} parent=1 // pred_check_branch
      %24 = sbr.rel (0) target = $region13
    $region12: #{tpu_custom_call.1} parent=1 // pred_region
      %25 = dma.done [#allocation3], 6144
    $region13: #{tpu_custom_call.1} parent=1 // pred_fallthru
      _
    %v26 = vld [vmem:[%s0] sm:$0xff]
    %v27 = vld [vmem:[%s0 + $0x8] sm:$0xff]
    %v28 = vlaneseq
    %v29 = vand.u32 %v28, 127
    %v30 = vadd.s32 %v29, 128
    %v31 = vadd.s32 %v29, 256
    %32 = vset.pattern.permute.xlu0 0
    %33 = vperm.xlu0 %32, %v26
    %v34 = vpop.permute.xlu0 %33
    %35 = vset.pattern.permute.xlu0 0
    %36 = vperm.xlu0 %35, %v27
    %v37 = vpop.permute.xlu0 %36
    %vm38 = vcmp.eq.s32.totalorder %v34, %v29
    %vm39 = vcmp.eq.s32.totalorder %v34, %v30
    %vm40 = vcmp.eq.s32.totalorder %v34, %v31
    %vm41 = vcmp.eq.s32.totalorder %v37, %v29
    %vm42 = vcmp.eq.s32.totalorder %v37, %v30
    %vm43 = vcmp.eq.s32.totalorder %v37, %v31
    %44 = vset.pattern.permute.xlu0 1
    %45 = vperm.xlu0 %44, %v26
    %v46 = vpop.permute.xlu0 %45
    %47 = vset.pattern.permute.xlu0 1
    %48 = vperm.xlu0 %47, %v27
    %v49 = vpop.permute.xlu0 %48
    %vm50 = vcmp.eq.s32.totalorder %v46, %v29
    %vm51 = vcmp.eq.s32.totalorder %v46, %v30
    %vm52 = vcmp.eq.s32.totalorder %v46, %v31
    %vm53 = vcmp.eq.s32.totalorder %v49, %v29
    %vm54 = vcmp.eq.s32.totalorder %v49, %v30
    %vm55 = vcmp.eq.s32.totalorder %v49, %v31
    %56 = vset.pattern.permute.xlu0 2
    %57 = vperm.xlu0 %56, %v26
    %v58 = vpop.permute.xlu0 %57
    %59 = vset.pattern.permute.xlu0 2
    %60 = vperm.xlu0 %59, %v27
    %v61 = vpop.permute.xlu0 %60
    %vm62 = vcmp.eq.s32.totalorder %v58, %v29
    %vm63 = vcmp.eq.s32.totalorder %v58, %v30
    %vm64 = vcmp.eq.s32.totalorder %v58, %v31
    %vm65 = vcmp.eq.s32.totalorder %v61, %v29
    %vm66 = vcmp.eq.s32.totalorder %v61, %v30
    %vm67 = vcmp.eq.s32.totalorder %v61, %v31
    %68 = vset.pattern.permute.xlu0 3
    %69 = vperm.xlu0 %68, %v26
    %v70 = vpop.permute.xlu0 %69
    %71 = vset.pattern.permute.xlu0 3
    %72 = vperm.xlu0 %71, %v27
    %v73 = vpop.permute.xlu0 %72
    %vm74 = vcmp.eq.s32.totalorder %v70, %v29
    %vm75 = vcmp.eq.s32.totalorder %v70, %v30
    %vm76 = vcmp.eq.s32.totalorder %v70, %v31
    %vm77 = vcmp.eq.s32.totalorder %v73, %v29
    %vm78 = vcmp.eq.s32.totalorder %v73, %v30
    %vm79 = vcmp.eq.s32.totalorder %v73, %v31
    %vm80 = vmor %vm38, %vm50
    %vm81 = vmor %vm39, %vm51
    %vm82 = vmor %vm40, %vm52
    %vm83 = vmor %vm41, %vm53
    %vm84 = vmor %vm42, %vm54
    %vm85 = vmor %vm43, %vm55
    %vm86 = vmor %vm62, %vm74
    %vm87 = vmor %vm63, %vm75
    %vm88 = vmor %vm64, %vm76
    %vm89 = vmor %vm65, %vm77
    %vm90 = vmor %vm66, %vm78
    %vm91 = vmor %vm67, %vm79
    %vm92 = vmor %vm80, %vm86
    %vm93 = vmor %vm81, %vm87
    %vm94 = vmor %vm82, %vm88
    %vm95 = vmor %vm83, %vm89
    %vm96 = vmor %vm84, %vm90
    %vm97 = vmor %vm85, %vm91
    %v98 = vsel %vm92, 1, 0
    %v99 = vsel %vm93, 1, 0
    %v100 = vsel %vm94, 1, 0
    %v101 = vsel %vm95, 1, 0
    %v102 = vsel %vm96, 1, 0
    %v103 = vsel %vm97, 1, 0
    %v104 = vcvt.s32.f32 %v98
    %v105 = vcvt.s32.f32 %v99
    %v106 = vcvt.s32.f32 %v100
    %v107 = vcvt.s32.f32 %v101
    %v108 = vcvt.s32.f32 %v102
    %v109 = vcvt.s32.f32 %v103
    %v110 = vld [vmem:[#allocation2] sm:$0xff]
    %v111 = vld [vmem:[#allocation2 + $0x8] sm:$0xff]
    %v112 = vld [vmem:[#allocation2 + $0x10] sm:$0xff]
    %v113 = vld [vmem:[#allocation2 + $0x18] sm:$0xff]
    %v114 = vld [vmem:[#allocation2 + $0x20] sm:$0xff]
    %v115 = vld [vmem:[#allocation2 + $0x28] sm:$0xff]
    %v116 = vld [vmem:[#allocation2 + $0x30] sm:$0xff]
    %v117 = vld [vmem:[#allocation2 + $0x38] sm:$0xff]
    %v118 = vld [vmem:[#allocation2 + $0x40] sm:$0xff]
    %v119 = vld [vmem:[#allocation2 + $0x48] sm:$0xff]
    %v120 = vld [vmem:[#allocation2 + $0x50] sm:$0xff]
    %v121 = vld [vmem:[#allocation2 + $0x58] sm:$0xff]
    %v122 = vld [vmem:[#allocation2 + $0x60] sm:$0xff]
    %v123 = vld [vmem:[#allocation2 + $0x68] sm:$0xff]
    %v124 = vld [vmem:[#allocation2 + $0x70] sm:$0xff]
    %v125 = vld [vmem:[#allocation2 + $0x78] sm:$0xff]
    %v126 = vld [vmem:[#allocation2 + $0x80] sm:$0xff]
    %v127 = vld [vmem:[#allocation2 + $0x88] sm:$0xff]
    %v128 = vld [vmem:[#allocation2 + $0x90] sm:$0xff]
    %v129 = vld [vmem:[#allocation2 + $0x98] sm:$0xff]
    %v130 = vld [vmem:[#allocation2 + $0xa0] sm:$0xff]
    %v131 = vld [vmem:[#allocation2 + $0xa8] sm:$0xff]
    %v132 = vld [vmem:[#allocation2 + $0xb0] sm:$0xff]
    %v133 = vld [vmem:[#allocation2 + $0xb8] sm:$0xff]
    %v134 = vld [vmem:[#allocation2 + $0xc0] sm:$0xff]
    %v135 = vld [vmem:[#allocation2 + $0xc8] sm:$0xff]
    %v136 = vld [vmem:[#allocation2 + $0xd0] sm:$0xff]
    %v137 = vld [vmem:[#allocation2 + $0xd8] sm:$0xff]
    %v138 = vld [vmem:[#allocation2 + $0xe0] sm:$0xff]
    %v139 = vld [vmem:[#allocation2 + $0xe8] sm:$0xff]
    %v140 = vld [vmem:[#allocation2 + $0xf0] sm:$0xff]
    %v141 = vld [vmem:[#allocation2 + $0xf8] sm:$0xff]
    %v142 = vld [vmem:[#allocation2 + $0x100] sm:$0xff]
    %v143 = vld [vmem:[#allocation2 + $0x108] sm:$0xff]
    %v144 = vld [vmem:[#allocation2 + $0x110] sm:$0xff]
    %v145 = vld [vmem:[#allocation2 + $0x118] sm:$0xff]
    %v146 = vld [vmem:[#allocation2 + $0x120] sm:$0xff]
    %v147 = vld [vmem:[#allocation2 + $0x128] sm:$0xff]
    %v148 = vld [vmem:[#allocation2 + $0x130] sm:$0xff]
    %v149 = vld [vmem:[#allocation2 + $0x138] sm:$0xff]
    %v150 = vld [vmem:[#allocation2 + $0x140] sm:$0xff]
    %v151 = vld [vmem:[#allocation2 + $0x148] sm:$0xff]
    %v152 = vld [vmem:[#allocation2 + $0x150] sm:$0xff]
    %v153 = vld [vmem:[#allocation2 + $0x158] sm:$0xff]
    %v154 = vld [vmem:[#allocation2 + $0x160] sm:$0xff]
    %v155 = vld [vmem:[#allocation2 + $0x168] sm:$0xff]
    %v156 = vld [vmem:[#allocation2 + $0x170] sm:$0xff]
    %v157 = vld [vmem:[#allocation2 + $0x178] sm:$0xff]
    %158 = vmatprep.subr.mxu0 0.0
    %159 = vmatpush1.msra.mxu0 %v125
    %160 = vmatprep.subr.mxu0 0.0
    %161 = vmatpush1.msra.mxu0 %v124
    %162 = vmatprep.subr.mxu0 0.0
    %163 = vmatpush1.msra.mxu0 %v123
    %164 = vmatprep.subr.mxu0 0.0
    %165 = vmatpush1.msra.mxu0 %v122
    %166 = vmatprep.subr.mxu0 0.0
    %167 = vmatpush1.msra.mxu0 %v121
    %168 = vmatprep.subr.mxu0 0.0
    %169 = vmatpush1.msra.mxu0 %v120
    %170 = vmatprep.subr.mxu0 0.0
    %171 = vmatpush1.msra.mxu0 %v119
    %172 = vmatprep.subr.mxu0 0.0
    %173 = vmatpush1.msra.mxu0 %v118
    %174 = vmatprep.subr.mxu0 0.0
    %175 = vmatpush1.msra.mxu0 %v117
    %176 = vmatprep.subr.mxu0 0.0
    %177 = vmatpush1.msra.mxu0 %v116
    %178 = vmatprep.subr.mxu0 0.0
    %179 = vmatpush1.msra.mxu0 %v115
    %180 = vmatprep.subr.mxu0 0.0
    %181 = vmatpush1.msra.mxu0 %v114
    %182 = vmatprep.subr.mxu0 0.0
    %183 = vmatpush1.msra.mxu0 %v113
    %184 = vmatprep.subr.mxu0 0.0
    %185 = vmatpush1.msra.mxu0 %v112
    %186 = vmatprep.subr.mxu0 0.0
    %187 = vmatpush1.msra.mxu0 %v111
    %188 = vmatprep.subr.mxu0 0.0
    %189 = vmatpush1.msra.mxu0 %v110
    %190 = vmatprep.subr.mxu0 0.0
    %191 = vmatpush2.msra.mxu0 %v141
    %192 = vmatprep.subr.mxu0 0.0
    %193 = vmatpush2.msra.mxu0 %v140
    %194 = vmatprep.subr.mxu0 0.0
    %195 = vmatpush2.msra.mxu0 %v139
    %196 = vmatprep.subr.mxu0 0.0
    %197 = vmatpush2.msra.mxu0 %v138
    %198 = vmatprep.subr.mxu0 0.0
    %199 = vmatpush2.msra.mxu0 %v137
    %200 = vmatprep.subr.mxu0 0.0
    %201 = vmatpush2.msra.mxu0 %v136
    %202 = vmatprep.subr.mxu0 0.0
    %203 = vmatpush2.msra.mxu0 %v135
    %204 = vmatprep.subr.mxu0 0.0
    %205 = vmatpush2.msra.mxu0 %v134
    %206 = vmatprep.subr.mxu0 0.0
    %207 = vmatpush2.msra.mxu0 %v133
    %208 = vmatprep.subr.mxu0 0.0
    %209 = vmatpush2.msra.mxu0 %v132
    %210 = vmatprep.subr.mxu0 0.0
    %211 = vmatpush2.msra.mxu0 %v131
    %212 = vmatprep.subr.mxu0 0.0
    %213 = vmatpush2.msra.mxu0 %v130
    %214 = vmatprep.subr.mxu0 0.0
    %215 = vmatpush2.msra.mxu0 %v129
    %216 = vmatprep.subr.mxu0 0.0
    %217 = vmatpush2.msra.mxu0 %v128
    %218 = vmatprep.subr.mxu0 0.0
    %219 = vmatpush2.msra.mxu0 %v127
    %220 = vmatprep.subr.mxu0 0.0
    %221 = vmatpush2.msra.mxu0 %v126
    %222 = vmatprep.mubr.f32.mxu0 %v105
    %223 = vmatmul.mubr.f32.gmra.mxu0 %v104
    %v224 = vpop.f32.mrf.mxu0
    %v225 = vadd.f32 0.0, %v224
    %v226 = vpop.f32.mrf.mxu0
    %227 = vmatprep.mubr.f32.mxu0 %v108
    %228 = vmatmul.mubr.f32.gmra.mxu0 %v107
    %v229 = vpop.f32.mrf.mxu0
    %v230 = vadd.f32 0.0, %v229
    %v231 = vpop.f32.mrf.mxu0
    %232 = vdwg.mxu0
    %233 = vmatprep.subr.mxu0 0.0
    %234 = vmatpush1.msra.mxu0 %v157
    %235 = vmatprep.subr.mxu0 0.0
    %236 = vmatpush1.msra.mxu0 %v156
    %237 = vmatprep.subr.mxu0 0.0
    %238 = vmatpush1.msra.mxu0 %v155
    %239 = vmatprep.subr.mxu0 0.0
    %240 = vmatpush1.msra.mxu0 %v154
    %241 = vmatprep.subr.mxu0 0.0
    %242 = vmatpush1.msra.mxu0 %v153
    %243 = vmatprep.subr.mxu0 0.0
    %244 = vmatpush1.msra.mxu0 %v152
    %245 = vmatprep.subr.mxu0 0.0
    %246 = vmatpush1.msra.mxu0 %v151
    %247 = vmatprep.subr.mxu0 0.0
    %248 = vmatpush1.msra.mxu0 %v150
    %249 = vmatprep.subr.mxu0 0.0
    %250 = vmatpush1.msra.mxu0 %v149
    %251 = vmatprep.subr.mxu0 0.0
    %252 = vmatpush1.msra.mxu0 %v148
    %253 = vmatprep.subr.mxu0 0.0
    %254 = vmatpush1.msra.mxu0 %v147
    %255 = vmatprep.subr.mxu0 0.0
    %256 = vmatpush1.msra.mxu0 %v146
    %257 = vmatprep.subr.mxu0 0.0
    %258 = vmatpush1.msra.mxu0 %v145
    %259 = vmatprep.subr.mxu0 0.0
    %260 = vmatpush1.msra.mxu0 %v144
    %261 = vmatprep.subr.mxu0 0.0
    %262 = vmatpush1.msra.mxu0 %v143
    %263 = vmatprep.subr.mxu0 0.0
    %264 = vmatpush1.msra.mxu0 %v142
    %265 = vmatprep.subr.mxu0 0.0
    %266 = vmatpush2.msra.mxu0 0.0
    %267 = vmatprep.subr.mxu0 0.0
    %268 = vmatpush2.msra.mxu0 0.0
    %269 = vmatprep.subr.mxu0 0.0
    %270 = vmatpush2.msra.mxu0 0.0
    %271 = vmatprep.subr.mxu0 0.0
    %272 = vmatpush2.msra.mxu0 0.0
    %273 = vmatprep.subr.mxu0 0.0
    %274 = vmatpush2.msra.mxu0 0.0
    %275 = vmatprep.subr.mxu0 0.0
    %276 = vmatpush2.msra.mxu0 0.0
    %277 = vmatprep.subr.mxu0 0.0
    %278 = vmatpush2.msra.mxu0 0.0
    %279 = vmatprep.subr.mxu0 0.0
    %280 = vmatpush2.msra.mxu0 0.0
    %281 = vmatprep.subr.mxu0 0.0
    %282 = vmatpush2.msra.mxu0 0.0
    %283 = vmatprep.subr.mxu0 0.0
    %284 = vmatpush2.msra.mxu0 0.0
    %285 = vmatprep.subr.mxu0 0.0
    %286 = vmatpush2.msra.mxu0 0.0
    %287 = vmatprep.subr.mxu0 0.0
    %288 = vmatpush2.msra.mxu0 0.0
    %289 = vmatprep.subr.mxu0 0.0
    %290 = vmatpush2.msra.mxu0 0.0
    %291 = vmatprep.subr.mxu0 0.0
    %292 = vmatpush2.msra.mxu0 0.0
    %293 = vmatprep.subr.mxu0 0.0
    %294 = vmatpush2.msra.mxu0 0.0
    %295 = vmatprep.subr.mxu0 0.0
    %296 = vmatpush2.msra.mxu0 0.0
    %297 = vmatprep.mubr.f32.mxu0 0.0
    %298 = vmatmul.mubr.f32.gmra.mxu0 %v106
    %v299 = vpop.f32.mrf.mxu0
    %v300 = vadd.f32 %v225, %v299
    %v301 = vpop.f32.mrf.mxu0
    %302 = vmatprep.mubr.f32.mxu0 0.0
    %303 = vmatmul.mubr.f32.gmra.mxu0 %v109
    %v304 = vpop.f32.mrf.mxu0
    %v305 = vadd.f32 %v230, %v304
    %v306 = vpop.f32.mrf.mxu0
    %307 = vdwg.mxu0
    %308 = vst [vmem:[#allocation5] sm:$0xff] %v300
    %309 = vst [vmem:[#allocation5 + $0x8] sm:$0xff] %v305
    // Predicated region
    $region14: #{tpu_custom_call.1} parent=1 // pred_check
      _
    $region15: #{tpu_custom_call.1} parent=1 // pred_check_branch
      %311 = sbr.rel (0) target = $region17
    $region16: #{tpu_custom_call.1} parent=1 // pred_region
      %s313 = ssub.s32 256, 256
      %314 = vsyncadd [#allocation4], %s313
      %s315 = sshll.u32 [#allocation5], 4
      %s316 = int_to_ptr.vmem [resolvable:$true] %s315
      %321 = dma.vmem_to_hbm [thread:$0]  %s316, 256, %s2, [#allocation4], 128, 128, 8
    $region17: #{tpu_custom_call.1} parent=1 // pred_fallthru
      _
    // Predicated region
    $region18: #{tpu_custom_call.1} parent=1 // pred_check
      _
    $region19: #{tpu_custom_call.1} parent=1 // pred_check_branch
      %323 = sbr.rel (0) target = $region21
    $region20: #{tpu_custom_call.1} parent=1 // pred_region
      %324 = dma.done [#allocation4], 256
    $region21: #{tpu_custom_call.1} parent=1 // pred_fallthru
      _
    %325 = vsyncpa [#allocation3], 1
    %326 = vsyncpa [#allocation4], 1

</llo_original>
